<compile_context>
chip_gen: v7x
topology: tpu7x:2x2x1
jax: 0.10.0
libtpu: 0.0.40
codegen_flags: <defaults>
</compile_context>

<pallas_src>
import functools
import math

import jax
import jax.numpy as jnp
from jax.experimental import pallas as pl
from jax.experimental.pallas import tpu as pltpu

_EPS = 1e-12


def _relaxed_ms_kernel(s_tile_ref, t_tile_ref, sT_ref, tT_ref, ssq_ref, tsq_ref,
                       loss_ref, *, sigma, delta, scale_pos, scale_neg, half,
                       tile_rows, neg_pow):
    f32 = jnp.float32
    tm = tile_rows
    n = sT_ref.shape[1]

    # ---- index masks: (tm,1) and (1,n) iotas, broadcast inside the compares ----
    row = (jax.lax.broadcasted_iota(jnp.int32, (tm, 1), 0)
           + pl.program_id(0) * tm)                        # global row ids, (tm, 1)
    col = jax.lax.broadcasted_iota(jnp.int32, (1, n), 1)   # (1, n)
    diag = row == col                                       # (tm, n) bool
    pos_pair = (col == row + half) | (row == col + half)    # anchor/positive pairs

    contract = (((1,), (0,)), ((), ()))  # [tm,D] x [D,N] -> [tm,N] (plain MXU matmul)

    # ---- student branch first (s_d2 / gram_s fully consumed before teacher) ----
    s_tile = s_tile_ref[...]                                 # (tm, D), pre-normalized
    s_tile_f = s_tile.astype(f32)
    s_row_sq = jnp.sum(s_tile_f * s_tile_f, axis=1, keepdims=True)       # (tm, 1)
    gram_s = jax.lax.dot_general(s_tile, sT_ref[...], contract,
                                 preferred_element_type=f32)             # (tm, n)
    s_d2 = jnp.maximum(s_row_sq + ssq_ref[...] - 2.0 * gram_s, _EPS)     # clamp(min=eps)
    p = jnp.exp(s_d2 * (-1.0 / sigma))
    p = jnp.where(diag | pos_pair, 1.0, p)                   # diag & positive pairs -> 1

    # ---- teacher branch ----
    t_tile = t_tile_ref[...]
    t_tile_f = t_tile.astype(f32)
    t_row_sq = jnp.sum(t_tile_f * t_tile_f, axis=1, keepdims=True)
    gram_t = jax.lax.dot_general(t_tile, tT_ref[...], contract,
                                 preferred_element_type=f32)
    t_d = jnp.sqrt(jnp.maximum(t_row_sq + tsq_ref[...] - 2.0 * gram_t, _EPS))
    t_d = jnp.where(diag, 0.0, t_d)                          # pdist zeroes the diagonal
    # mean is over the full row (including the zeroed diagonal), like the reference
    inv_mean = pl.reciprocal(jnp.mean(t_d, axis=1, keepdims=True))       # exact
    t_dn = t_d * inv_mean

    # ---- multi-similarity terms ----
    pos_e = jnp.exp(scale_pos * t_dn)
    if neg_pow is not None:
        # scale_neg == neg_pow * scale_pos (trace-time):
        # exp(-scale_neg*t) == 1 / exp(scale_pos*t)**neg_pow  -> one fewer exp map.
        e_pow = pos_e
        for _ in range(neg_pow - 1):
            e_pow = e_pow * pos_e
        neg_e = pl.reciprocal(e_pow)                          # exact reciprocal
    else:
        neg_e = jnp.exp(-scale_neg * t_dn)

    neg_c = math.exp(scale_neg * delta)                       # trace-time constant
    # Diagonal contributes exactly +1 to the positive sum (p=1, t_dn=0 -> exp=1)
    # and exactly 0 to the negative one, so unmasked reductions suffice:
    #   log(1 + sum_{j!=i} pos) == log(sum_j pos).
    p_total = jnp.sum(p * pos_e, axis=1, keepdims=True)                   # (tm, 1)
    n_total = jnp.sum((1.0 - p) * (neg_c * neg_e), axis=1, keepdims=True)  # (tm, 1)

    loss_ref[...] = ((1.0 / scale_pos) * jnp.log(p_total)
                     + (1.0 / scale_neg) * jnp.log(1.0 + n_total))


def _vmem_budget_bytes():
    """Generation-aware scoped-VMEM budget with headroom under physical VMEM."""
    try:
        cap = int(getattr(pltpu.get_tpu_info(), "vmem_capacity_bytes", 0) or 0)
    except Exception:
        cap = 0
    if cap <= 0:
        return 48 << 20                        # safe default on every generation
    if cap >= (100 << 20):                     # v5e / v6e: 128 MiB physical
        return 96 << 20
    return max(cap - (16 << 20), 32 << 20)     # v7x: 64 MiB -> 48 MiB w/ headroom


def _vmem_estimate(tm, n, d, panel_bytes):
    panels = 2 * 2 * d * n * panel_bytes       # 2 resident (D,N) panels, 2-buffer safe
    tiles = 2 * 2 * tm * d * panel_bytes       # 2 double-buffered (tm,D) row tiles
    sqn = 2 * 2 * n * 4                        # (1,N) column squared norms
    temps = 12 * tm * n * 4                    # live (tm,N) f32 temporaries (conservative)
    out = 2 * tm * 4
    return panels + tiles + sqn + temps + out + (2 << 20)


def _pick_tile_rows(n, d, budget, panel_bytes):
    """Largest row tile (multiple of 8, divisor of N) whose footprint fits the budget."""
    for tm in (1024, 512, 256, 128, 64, 32, 16, 8):
        if tm <= n and n % tm == 0 and _vmem_estimate(tm, n, d, panel_bytes) <= budget:
            return tm
    return 8 if n % 8 == 0 else n              # tiny / irregular batch: single tile


def relaxed_ms(s_emb, t_emb, *, sigma=1.0, delta=1.0, scale_pos=1.0, scale_neg=2.0):
    """Pallas TPU implementation of Relaxed_MS.forward(s_emb, t_emb)."""
    assert s_emb.shape == t_emb.shape and s_emb.ndim == 2
    n, d = s_emb.shape
    assert n % 2 == 0, "batch must be even (anchor/positive pairing)"

    f32 = jnp.float32
    # MXU operands stay bf16 only when both inputs are bf16 (halves panel VMEM,
    # native MXU rate); all distance / exp math is f32 inside the kernel.
    mx_dtype = (jnp.bfloat16
                if (s_emb.dtype == jnp.bfloat16 and t_emb.dtype == jnp.bfloat16)
                else f32)

    # ---- panel-invariant O(N*D) work hoisted out of the kernel (runs once) ----
    s32 = s_emb.astype(f32)
    s_norm = jnp.sqrt(jnp.sum(s32 * s32, axis=1, keepdims=True))
    sn = (s32 / jnp.maximum(s_norm, _EPS)).astype(mx_dtype)   # F.normalize(s_emb, dim=1)
    tn = t_emb.astype(mx_dtype)

    snT = sn.T                                                 # (D, N) resident panels ->
    tnT = tn.T                                                 # plain [tm,D]x[D,N] matmuls
    sn_f = sn.astype(f32)
    tn_f = tn.astype(f32)
    ssq = jnp.sum(sn_f * sn_f, axis=1)[None, :]                # (1, N) column sq-norms
    tsq = jnp.sum(tn_f * tn_f, axis=1)[None, :]

    budget = _vmem_budget_bytes()
    panel_bytes = 2 if mx_dtype == jnp.bfloat16 else 4
    tm = _pick_tile_rows(n, d, budget, panel_bytes)
    grid = (n // tm,)

    # Trace-time specialization: scale_neg = k * scale_pos with small integer k.
    neg_pow = None
    if float(scale_pos) > 0.0:
        r = float(scale_neg) / float(scale_pos)
        k = int(round(r))
        if 1 <= k <= 4 and abs(r - k) < 1e-9:
            neg_pow = k

    kernel = functools.partial(
        _relaxed_ms_kernel,
        sigma=float(sigma), delta=float(delta),
        scale_pos=float(scale_pos), scale_neg=float(scale_neg),
        half=n // 2, tile_rows=tm, neg_pow=neg_pow,
    )

    est = _vmem_estimate(tm, n, d, panel_bytes)
    vmem_limit = int(min(max(est, 16 << 20), budget))

    losses = pl.pallas_call(
        kernel,
        out_shape=jax.ShapeDtypeStruct((n, 1), jnp.float32),
        grid_spec=pltpu.PrefetchScalarGridSpec(
            num_scalar_prefetch=0,
            grid=grid,
            in_specs=[
                pl.BlockSpec((tm, d), lambda i: (i, 0)),   # normalized student row tile
                pl.BlockSpec((tm, d), lambda i: (i, 0)),   # teacher row tile
                pl.BlockSpec((d, n), lambda i: (0, 0)),    # student panel^T (resident)
                pl.BlockSpec((d, n), lambda i: (0, 0)),    # teacher panel^T (resident)
                pl.BlockSpec((1, n), lambda i: (0, 0)),    # student col squared norms
                pl.BlockSpec((1, n), lambda i: (0, 0)),    # teacher col squared norms
            ],
            out_specs=pl.BlockSpec((tm, 1), lambda i: (i, 0)),
        ),
        compiler_params=pltpu.CompilerParams(
            dimension_semantics=("parallel",),
            vmem_limit_bytes=vmem_limit,
        ),
    )(sn, tn, snT, tnT, ssq, tsq)

    # losses[losses > 0].mean()  (tiny O(N) reduction; NaN when empty, like torch)
    per_row = losses[:, 0]
    mask = per_row > 0.0
    total = jnp.sum(jnp.where(mask, per_row, 0.0))
    count = jnp.sum(mask.astype(jnp.float32))
    return total / count


if __name__ == "__main__":
    key = jax.random.PRNGKey(0)
    k_s, k_t = jax.random.split(key)
    N, D = 8, 32  # batch of 8 embeddings (4 anchor/positive pairs), hidden=32
    s_emb = jax.random.normal(k_s, (N, D), dtype=jnp.float32)
    t_emb = jax.random.normal(k_t, (N, D), dtype=jnp.float32)

    loss = relaxed_ms(s_emb, t_emb)
    jax.block_until_ready(loss)
    print("KERNEL_OK")
</pallas_src>

<mosaic_0001>
module attributes {stable_mosaic.version = 11 : i64} {
  func.func @_relaxed_ms_kernel(%arg0: i32, %arg1: memref<8x32xf32, #tpu.memory_space<vmem>>, %arg2: memref<8x32xf32, #tpu.memory_space<vmem>>, %arg3: memref<32x8xf32, #tpu.memory_space<vmem>>, %arg4: memref<32x8xf32, #tpu.memory_space<vmem>>, %arg5: memref<1x8xf32, #tpu.memory_space<vmem>>, %arg6: memref<1x8xf32, #tpu.memory_space<vmem>>, %arg7: memref<8x1xf32, #tpu.memory_space<vmem>>) attributes {dimension_semantics = [#tpu.dimension_semantics<parallel>], iteration_bounds = array<i64: 1>, scalar_prefetch = 0 : i64, scratch_operands = 0 : i64, tpu.core_type = #tpu.core_type<tc>, window_params = [{transform_indices = @transform_0, window_bounds = array<i64: 8, 32>}, {transform_indices = @transform_1, window_bounds = array<i64: 8, 32>}, {pipeline_mode = #tpu.pipeline_mode<synchronous>, transform_indices = @transform_2, window_bounds = array<i64: 32, 8>}, {pipeline_mode = #tpu.pipeline_mode<synchronous>, transform_indices = @transform_3, window_bounds = array<i64: 32, 8>}, {pipeline_mode = #tpu.pipeline_mode<synchronous>, transform_indices = @transform_4, window_bounds = array<i64: 1, 8>}, {pipeline_mode = #tpu.pipeline_mode<synchronous>, transform_indices = @transform_5, window_bounds = array<i64: 1, 8>}, {transform_indices = @transform_6, window_bounds = array<i64: 8, 1>}]} {
    %0 = tpu.iota {dimensions = array<i32: 0>} : vector<8x1xi32>
    %c8_i32 = arith.constant 8 : i32
    %1 = arith.muli %arg0, %c8_i32 : i32
    %2 = vector.broadcast %1 : i32 to vector<8x1xi32>
    %3 = arith.addi %0, %2 : vector<8x1xi32>
    %4 = tpu.iota {dimensions = array<i32: 1>} : vector<1x8xi32>
    %5 = vector.broadcast %3 : vector<8x1xi32> to vector<8x8xi32>
    %6 = vector.broadcast %4 : vector<1x8xi32> to vector<8x8xi32>
    %7 = arith.cmpi eq, %5, %6 : vector<8x8xi32>
    %c4_i32 = arith.constant 4 : i32
    %8 = vector.broadcast %c4_i32 : i32 to vector<8x1xi32>
    %9 = arith.addi %3, %8 : vector<8x1xi32>
    %10 = vector.broadcast %4 : vector<1x8xi32> to vector<8x8xi32>
    %11 = vector.broadcast %9 : vector<8x1xi32> to vector<8x8xi32>
    %12 = arith.cmpi eq, %10, %11 : vector<8x8xi32>
    %c4_i32_0 = arith.constant 4 : i32
    %13 = vector.broadcast %c4_i32_0 : i32 to vector<1x8xi32>
    %14 = arith.addi %4, %13 : vector<1x8xi32>
    %15 = vector.broadcast %3 : vector<8x1xi32> to vector<8x8xi32>
    %16 = vector.broadcast %14 : vector<1x8xi32> to vector<8x8xi32>
    %17 = arith.cmpi eq, %15, %16 : vector<8x8xi32>
    %18 = arith.ori %12, %17 : vector<8x8xi1>
    %c0 = arith.constant 0 : index
    %c0_1 = arith.constant 0 : index
    %19 = vector.load %arg1[%c0, %c0_1] : memref<8x32xf32, #tpu.memory_space<vmem>>, vector<8x32xf32>
    %20 = arith.mulf %19, %19 : vector<8x32xf32>
    %cst = arith.constant dense<0.000000e+00> : vector<8xf32>
    %21 = vector.multi_reduction <add>, %20, %cst [1] : vector<8x32xf32> to vector<8xf32>
    %22 = vector.shape_cast %21 : vector<8xf32> to vector<8x1xf32>
    %c0_2 = arith.constant 0 : index
    %c0_3 = arith.constant 0 : index
    %23 = vector.load %arg3[%c0_2, %c0_3] : memref<32x8xf32, #tpu.memory_space<vmem>>, vector<32x8xf32>
    %cst_4 = arith.constant dense<0.000000e+00> : vector<8x8xf32>
    %24 = tpu.matmul %19, %23, %cst_4 {dimension_numbers = #tpu.dot_dimension_numbers<[1], [0], [0], [1], [0, 0, 1, 1], [], []>} : vector<8x32xf32>, vector<32x8xf32>, vector<8x8xf32> -> vector<8x8xf32>
    %c0_5 = arith.constant 0 : index
    %c0_6 = arith.constant 0 : index
    %25 = vector.load %arg5[%c0_5, %c0_6] : memref<1x8xf32, #tpu.memory_space<vmem>>, vector<1x8xf32>
    %26 = vector.broadcast %22 : vector<8x1xf32> to vector<8x8xf32>
    %27 = vector.broadcast %25 : vector<1x8xf32> to vector<8x8xf32>
    %28 = arith.addf %26, %27 : vector<8x8xf32>
    %cst_7 = arith.constant 2.000000e+00 : f32
    %29 = vector.broadcast %cst_7 : f32 to vector<8x8xf32>
    %30 = arith.mulf %29, %24 : vector<8x8xf32>
    %31 = arith.subf %28, %30 : vector<8x8xf32>
    %cst_8 = arith.constant 9.99999996E-13 : f32
    %32 = vector.broadcast %cst_8 : f32 to vector<8x8xf32>
    %33 = arith.maximumf %31, %32 : vector<8x8xf32>
    %cst_9 = arith.constant -1.000000e+00 : f32
    %34 = vector.broadcast %cst_9 : f32 to vector<8x8xf32>
    %35 = arith.mulf %33, %34 : vector<8x8xf32>
    %36 = math.exp %35 : vector<8x8xf32>
    %37 = arith.ori %7, %18 : vector<8x8xi1>
    %cst_10 = arith.constant 1.000000e+00 : f32
    %38 = vector.broadcast %cst_10 : f32 to vector<8x8xf32>
    %39 = arith.select %37, %38, %36 : vector<8x8xi1>, vector<8x8xf32>
    %c0_11 = arith.constant 0 : index
    %c0_12 = arith.constant 0 : index
    %40 = vector.load %arg2[%c0_11, %c0_12] : memref<8x32xf32, #tpu.memory_space<vmem>>, vector<8x32xf32>
    %41 = arith.mulf %40, %40 : vector<8x32xf32>
    %cst_13 = arith.constant dense<0.000000e+00> : vector<8xf32>
    %42 = vector.multi_reduction <add>, %41, %cst_13 [1] : vector<8x32xf32> to vector<8xf32>
    %43 = vector.shape_cast %42 : vector<8xf32> to vector<8x1xf32>
    %c0_14 = arith.constant 0 : index
    %c0_15 = arith.constant 0 : index
    %44 = vector.load %arg4[%c0_14, %c0_15] : memref<32x8xf32, #tpu.memory_space<vmem>>, vector<32x8xf32>
    %cst_16 = arith.constant dense<0.000000e+00> : vector<8x8xf32>
    %45 = tpu.matmul %40, %44, %cst_16 {dimension_numbers = #tpu.dot_dimension_numbers<[1], [0], [0], [1], [0, 0, 1, 1], [], []>} : vector<8x32xf32>, vector<32x8xf32>, vector<8x8xf32> -> vector<8x8xf32>
    %c0_17 = arith.constant 0 : index
    %c0_18 = arith.constant 0 : index
    %46 = vector.load %arg6[%c0_17, %c0_18] : memref<1x8xf32, #tpu.memory_space<vmem>>, vector<1x8xf32>
    %47 = vector.broadcast %43 : vector<8x1xf32> to vector<8x8xf32>
    %48 = vector.broadcast %46 : vector<1x8xf32> to vector<8x8xf32>
    %49 = arith.addf %47, %48 : vector<8x8xf32>
    %cst_19 = arith.constant 2.000000e+00 : f32
    %50 = vector.broadcast %cst_19 : f32 to vector<8x8xf32>
    %51 = arith.mulf %50, %45 : vector<8x8xf32>
    %52 = arith.subf %49, %51 : vector<8x8xf32>
    %cst_20 = arith.constant 9.99999996E-13 : f32
    %53 = vector.broadcast %cst_20 : f32 to vector<8x8xf32>
    %54 = arith.maximumf %52, %53 : vector<8x8xf32>
    %55 = math.sqrt %54 : vector<8x8xf32>
    %cst_21 = arith.constant 0.000000e+00 : f32
    %56 = vector.broadcast %cst_21 : f32 to vector<8x8xf32>
    %57 = arith.select %7, %56, %55 : vector<8x8xi1>, vector<8x8xf32>
    %cst_22 = arith.constant dense<0.000000e+00> : vector<8xf32>
    %58 = vector.multi_reduction <add>, %57, %cst_22 [1] : vector<8x8xf32> to vector<8xf32>
    %59 = vector.shape_cast %58 : vector<8xf32> to vector<8x1xf32>
    %cst_23 = arith.constant 8.000000e+00 : f32
    %60 = vector.broadcast %cst_23 : f32 to vector<8x1xf32>
    %61 = arith.divf %59, %60 : vector<8x1xf32>
    %62 = tpu.reciprocal %61 : vector<8x1xf32> -> vector<8x1xf32>
    %63 = vector.broadcast %62 : vector<8x1xf32> to vector<8x8xf32>
    %64 = arith.mulf %57, %63 : vector<8x8xf32>
    %cst_24 = arith.constant 1.000000e+00 : f32
    %65 = vector.broadcast %cst_24 : f32 to vector<8x8xf32>
    %66 = arith.mulf %65, %64 : vector<8x8xf32>
    %67 = math.exp %66 : vector<8x8xf32>
    %68 = arith.mulf %67, %67 : vector<8x8xf32>
    %69 = tpu.reciprocal %68 : vector<8x8xf32> -> vector<8x8xf32>
    %70 = arith.mulf %39, %67 : vector<8x8xf32>
    %cst_25 = arith.constant dense<0.000000e+00> : vector<8xf32>
    %71 = vector.multi_reduction <add>, %70, %cst_25 [1] : vector<8x8xf32> to vector<8xf32>
    %72 = vector.shape_cast %71 : vector<8xf32> to vector<8x1xf32>
    %cst_26 = arith.constant 1.000000e+00 : f32
    %73 = vector.broadcast %cst_26 : f32 to vector<8x8xf32>
    %74 = arith.subf %73, %39 : vector<8x8xf32>
    %cst_27 = arith.constant 7.3890562 : f32
    %75 = vector.broadcast %cst_27 : f32 to vector<8x8xf32>
    %76 = arith.mulf %75, %69 : vector<8x8xf32>
    %77 = arith.mulf %74, %76 : vector<8x8xf32>
    %cst_28 = arith.constant dense<0.000000e+00> : vector<8xf32>
    %78 = vector.multi_reduction <add>, %77, %cst_28 [1] : vector<8x8xf32> to vector<8xf32>
    %79 = vector.shape_cast %78 : vector<8xf32> to vector<8x1xf32>
    %80 = math.log %72 : vector<8x1xf32>
    %cst_29 = arith.constant 1.000000e+00 : f32
    %81 = vector.broadcast %cst_29 : f32 to vector<8x1xf32>
    %82 = arith.mulf %81, %80 : vector<8x1xf32>
    %cst_30 = arith.constant 1.000000e+00 : f32
    %83 = vector.broadcast %cst_30 : f32 to vector<8x1xf32>
    %84 = arith.addf %83, %79 : vector<8x1xf32>
    %85 = math.log %84 : vector<8x1xf32>
    %cst_31 = arith.constant 5.000000e-01 : f32
    %86 = vector.broadcast %cst_31 : f32 to vector<8x1xf32>
    %87 = arith.mulf %86, %85 : vector<8x1xf32>
    %88 = arith.addf %82, %87 : vector<8x1xf32>
    %c0_32 = arith.constant 0 : index
    %c0_33 = arith.constant 0 : index
    %89 = vector.load %arg7[%c0_32, %c0_33] : memref<8x1xf32, #tpu.memory_space<vmem>>, vector<8x1xf32>
    tpu.vector_store %arg7[%c0_32, %c0_33], %88 {strides = array<i32>} : memref<8x1xf32, #tpu.memory_space<vmem>>, vector<8x1xf32>,
    return
  }
  func.func @transform_0(%arg0: i32) -> (i32, i32) {
    %c0_i32 = arith.constant 0 : i32
    %c0_i32_0 = arith.constant 0 : i32
    return %arg0, %c0_i32 : i32, i32
  }
  func.func @transform_1(%arg0: i32) -> (i32, i32) {
    %c0_i32 = arith.constant 0 : i32
    %c0_i32_0 = arith.constant 0 : i32
    return %arg0, %c0_i32 : i32, i32
  }
  func.func @transform_2(%arg0: i32) -> (i32, i32) {
    %c0_i32 = arith.constant 0 : i32
    %c0_i32_0 = arith.constant 0 : i32
    %c0_i32_1 = arith.constant 0 : i32
    return %c0_i32, %c0_i32_0 : i32, i32
  }
  func.func @transform_3(%arg0: i32) -> (i32, i32) {
    %c0_i32 = arith.constant 0 : i32
    %c0_i32_0 = arith.constant 0 : i32
    %c0_i32_1 = arith.constant 0 : i32
    return %c0_i32, %c0_i32_0 : i32, i32
  }
  func.func @transform_4(%arg0: i32) -> (i32, i32) {
    %c0_i32 = arith.constant 0 : i32
    %c0_i32_0 = arith.constant 0 : i32
    %c0_i32_1 = arith.constant 0 : i32
    return %c0_i32, %c0_i32_0 : i32, i32
  }
  func.func @transform_5(%arg0: i32) -> (i32, i32) {
    %c0_i32 = arith.constant 0 : i32
    %c0_i32_0 = arith.constant 0 : i32
    %c0_i32_1 = arith.constant 0 : i32
    return %c0_i32, %c0_i32_0 : i32, i32
  }
  func.func @transform_6(%arg0: i32) -> (i32, i32) {
    %c0_i32 = arith.constant 0 : i32
    %c0_i32_0 = arith.constant 0 : i32
    return %arg0, %c0_i32 : i32, i32
  }
}

</mosaic_0001>

<llo_original>
// kernel: tpu_custom_call.1
$region0: #{tpu_custom_call.1}
  #allocation0 [shape = 'u32[]', space=smem, size = 0x4, offset = 0x4, fixed_abs, tag = 'smem constant byte address 0x4 - core index']
  #allocation1 [shape = 'u32[144,128]{1,0:T(1,128)}', space=vmem, size = 0x12000, scoped, tag = 'internal scratch']
  %s0 = inlined_call_operand.vmem [shape: f32[8,32], index: 0, kind: input, shape index: {}]
  %s1 = inlined_call_operand.vmem [shape: f32[8,32], index: 1, kind: input, shape index: {}]
  %s2 = inlined_call_operand.vmem [shape: f32[32,8], index: 2, kind: input, shape index: {}]
  %s3 = inlined_call_operand.vmem [shape: f32[32,8], index: 3, kind: input, shape index: {}]
  %s4 = inlined_call_operand.vmem [shape: f32[1,8], index: 4, kind: input, shape index: {}]
  %s5 = inlined_call_operand.vmem [shape: f32[1,8], index: 5, kind: input, shape index: {}]
  %s6 = inlined_call_operand.vmem [shape: f32[8,1], index: 6, kind: output, shape index: {}]
  %s7 = sld [smem:[#allocation0]]
  $region34: #{tpu_custom_call.1} parent=0
    _
  %s9 = ssub.s32 1, %s7
  %s10 = scalar_select 0, %s9, %s7
  // Predicated region
  $region2: #{tpu_custom_call.1} parent=0 // pred_check
    _
  $region3: #{tpu_custom_call.1} parent=0 // pred_check_branch
    %12 = sbr.rel (0) target = $region5
  $region4: #{tpu_custom_call.1} parent=0 // pred_region
    _
  $region5: #{tpu_custom_call.1} parent=0 // pred_fallthru
    _
  // Predicated region
  $region6: #{tpu_custom_call.1} parent=0 // pred_check
    _
  $region7: #{tpu_custom_call.1} parent=0 // pred_check_branch
    %14 = sbr.rel (0) target = $region9
  $region8: #{tpu_custom_call.1} parent=0 // pred_region
    _
  $region9: #{tpu_custom_call.1} parent=0 // pred_fallthru
    _
  // Predicated region
  $region10: #{tpu_custom_call.1} parent=0 // pred_check
    _
  $region11: #{tpu_custom_call.1} parent=0 // pred_check_branch
    %16 = sbr.rel (0) target = $region13
  $region12: #{tpu_custom_call.1} parent=0 // pred_region
    _
  $region13: #{tpu_custom_call.1} parent=0 // pred_fallthru
    _
  // Predicated region
  $region14: #{tpu_custom_call.1} parent=0 // pred_check
    _
  $region15: #{tpu_custom_call.1} parent=0 // pred_check_branch
    %18 = sbr.rel (0) target = $region17
  $region16: #{tpu_custom_call.1} parent=0 // pred_region
    _
  $region17: #{tpu_custom_call.1} parent=0 // pred_fallthru
    _
  // Predicated region
  $region18: #{tpu_custom_call.1} parent=0 // pred_check
    _
  $region19: #{tpu_custom_call.1} parent=0 // pred_check_branch
    %20 = sbr.rel (0) target = $region21
  $region20: #{tpu_custom_call.1} parent=0 // pred_region
    _
  $region21: #{tpu_custom_call.1} parent=0 // pred_fallthru
    _
  // Predicated region
  $region22: #{tpu_custom_call.1} parent=0 // pred_check
    _
  $region23: #{tpu_custom_call.1} parent=0 // pred_check_branch
    %22 = sbr.rel (0) target = $region25
  $region24: #{tpu_custom_call.1} parent=0 // pred_region
    _
  $region25: #{tpu_custom_call.1} parent=0 // pred_fallthru
    _
  %v23 = vlaneseq
  %v24 = vshrl.u32 %v23, 7
  %s25 = smul.u32 0, 8
  %v26 = vstv %s25
  %v27 = vadd.s32 %v24, %v26
  %v28 = vlaneseq
  %v29 = vand.u32 %v28, 127
  %vm30 = vcmp.eq.s32.totalorder %v27, %v29
  %v31 = vadd.s32 %v27, 4
  %vm32 = vcmp.eq.s32.totalorder %v29, %v31
  %v33 = vadd.s32 %v29, 4
  %vm34 = vcmp.eq.s32.totalorder %v27, %v33
  %vm35 = vmor %vm32, %vm34
  %v36 = vld [vmem:[%s0] sm:$0xff]
  %v37 = vmul.f32 %v36, %v36
  %vm38 = vcmask 261120
  %v39 = vsel %vm38, %v37, 0.0
  %40 = vadd.xlane.f32.xlu0 %v39
  %v41 = vpop.xlane.xlu0 %40
  %v42 = vld [vmem:[%s2] sm:$0xff]
  %v43 = vld [vmem:[%s2 + $0x8] sm:$0xff]
  %v44 = vld [vmem:[%s2 + $0x10] sm:$0xff]
  %v45 = vld [vmem:[%s2 + $0x18] sm:$0xff]
  %v47 = vsel %vm38, %v36, 0
  %49 = vmatprep.subr.mxu0 0.0
  %50 = vmatpush1.msra.mxu0 %v42
  %51 = vmatprep.subr.mxu0 0.0
  %52 = vmatpush1.msra.mxu0 %v43
  %53 = vmatprep.subr.mxu0 0.0
  %54 = vmatpush1.msra.mxu0 %v44
  %55 = vmatprep.subr.mxu0 0.0
  %56 = vmatpush1.msra.mxu0 %v45
  %57 = vmatprep.subr.mxu0 0.0
  %58 = vmatpush1.msra.mxu0 0.0
  %59 = vmatprep.subr.mxu0 0.0
  %60 = vmatpush1.msra.mxu0 0.0
  %61 = vmatprep.subr.mxu0 0.0
  %62 = vmatpush1.msra.mxu0 0.0
  %63 = vmatprep.subr.mxu0 0.0
  %64 = vmatpush1.msra.mxu0 0.0
  %65 = vmatprep.subr.mxu0 0.0
  %66 = vmatpush1.msra.mxu0 0.0
  %67 = vmatprep.subr.mxu0 0.0
  %68 = vmatpush1.msra.mxu0 0.0
  %69 = vmatprep.subr.mxu0 0.0
  %70 = vmatpush1.msra.mxu0 0.0
  %71 = vmatprep.subr.mxu0 0.0
  %72 = vmatpush1.msra.mxu0 0.0
  %73 = vmatprep.subr.mxu0 0.0
  %74 = vmatpush1.msra.mxu0 0.0
  %75 = vmatprep.subr.mxu0 0.0
  %76 = vmatpush1.msra.mxu0 0.0
  %77 = vmatprep.subr.mxu0 0.0
  %78 = vmatpush1.msra.mxu0 0.0
  %79 = vmatprep.subr.mxu0 0.0
  %80 = vmatpush1.msra.mxu0 0.0
  %81 = vmatprep.subr.mxu0 0.0
  %82 = vmatpush1.msra.mxu0 0.0
  %83 = vmatprep.subr.mxu0 0.0
  %84 = vmatpush1.msra.mxu0 0.0
  %85 = vmatprep.subr.mxu0 0.0
  %86 = vmatpush1.msra.mxu0 0.0
  %87 = vmatprep.subr.mxu0 0.0
  %88 = vmatpush1.msra.mxu0 0.0
  %89 = vmatprep.subr.mxu0 0.0
  %90 = vmatpush1.msra.mxu0 0.0
  %91 = vmatprep.subr.mxu0 0.0
  %92 = vmatpush1.msra.mxu0 0.0
  %93 = vmatprep.subr.mxu0 0.0
  %94 = vmatpush1.msra.mxu0 0.0
  %95 = vmatprep.subr.mxu0 0.0
  %96 = vmatpush1.msra.mxu0 0.0
  %97 = vmatprep.subr.mxu0 0.0
  %98 = vmatpush1.msra.mxu0 0.0
  %99 = vmatprep.subr.mxu0 0.0
  %100 = vmatpush1.msra.mxu0 0.0
  %101 = vmatprep.subr.mxu0 0.0
  %102 = vmatpush1.msra.mxu0 0.0
  %103 = vmatprep.subr.mxu0 0.0
  %104 = vmatpush1.msra.mxu0 0.0
  %105 = vmatprep.subr.mxu0 0.0
  %106 = vmatpush1.msra.mxu0 0.0
  %107 = vmatprep.subr.mxu0 0.0
  %108 = vmatpush1.msra.mxu0 0.0
  %109 = vmatprep.subr.mxu0 0.0
  %110 = vmatpush1.msra.mxu0 0.0
  %111 = vmatprep.subr.mxu0 0.0
  %112 = vmatpush1.msra.mxu0 0.0
  %113 = vmatprep.mubr.f32.mxu0 0.0
  %114 = vmatmul.mubr.f32.gmra.mrb[0].mxu0 %v47
  %v115 = vpop.f32.mrb[0].mxu0
  %v116 = vadd.f32 0.0, %v115
  %v117 = vpop.f32.mrb[0].mxu0
  %118 = vdwg.mxu0
  %v119 = vld [vmem:[%s4] sm:$0x1]
  %v121 = vlaneseq
  %v122 = vshrl.u32 %v121, 7
  %v123 = vsub.s32 0, %v122
  %v124 = vrot.slane %v119, %v123
  %v126 = vadd.f32 %v41, %v124
  %v127 = vmul.f32 %v116, 2.0
  %v128 = vsub.f32 %v126, %v127
  %v129 = vmax.f32 %v128, 1e-12
  %v130 = vmul.f32 %v129, -1.0
  %v131 = vmul.f32 %v130, 1.442695
  %v132 = vpow.pop %v131
  %vm133 = vmor %vm30, %vm35
  %v134 = vsel %vm133, 1.0, %v132
  %v135 = vld [vmem:[%s1] sm:$0xff]
  %v136 = vmul.f32 %v135, %v135
  %v137 = vsel %vm38, %v136, 0.0
  %138 = vadd.xlane.f32.xlu0 %v137
  %v139 = vpop.xlane.xlu0 %138
  %v140 = vld [vmem:[%s3] sm:$0xff]
  %v141 = vld [vmem:[%s3 + $0x8] sm:$0xff]
  %v142 = vld [vmem:[%s3 + $0x10] sm:$0xff]
  %v143 = vld [vmem:[%s3 + $0x18] sm:$0xff]
  %v145 = vsel %vm38, %v135, 0
  %147 = vmatprep.subr.mxu0 0.0
  %148 = vmatpush1.msra.mxu0 %v140
  %149 = vmatprep.subr.mxu0 0.0
  %150 = vmatpush1.msra.mxu0 %v141
  %151 = vmatprep.subr.mxu0 0.0
  %152 = vmatpush1.msra.mxu0 %v142
  %153 = vmatprep.subr.mxu0 0.0
  %154 = vmatpush1.msra.mxu0 %v143
  %155 = vmatprep.subr.mxu0 0.0
  %156 = vmatpush1.msra.mxu0 0.0
  %157 = vmatprep.subr.mxu0 0.0
  %158 = vmatpush1.msra.mxu0 0.0
  %159 = vmatprep.subr.mxu0 0.0
  %160 = vmatpush1.msra.mxu0 0.0
  %161 = vmatprep.subr.mxu0 0.0
  %162 = vmatpush1.msra.mxu0 0.0
  %163 = vmatprep.subr.mxu0 0.0
  %164 = vmatpush1.msra.mxu0 0.0
  %165 = vmatprep.subr.mxu0 0.0
  %166 = vmatpush1.msra.mxu0 0.0
  %167 = vmatprep.subr.mxu0 0.0
  %168 = vmatpush1.msra.mxu0 0.0
  %169 = vmatprep.subr.mxu0 0.0
  %170 = vmatpush1.msra.mxu0 0.0
  %171 = vmatprep.subr.mxu0 0.0
  %172 = vmatpush1.msra.mxu0 0.0
  %173 = vmatprep.subr.mxu0 0.0
  %174 = vmatpush1.msra.mxu0 0.0
  %175 = vmatprep.subr.mxu0 0.0
  %176 = vmatpush1.msra.mxu0 0.0
  %177 = vmatprep.subr.mxu0 0.0
  %178 = vmatpush1.msra.mxu0 0.0
  %179 = vmatprep.subr.mxu0 0.0
  %180 = vmatpush1.msra.mxu0 0.0
  %181 = vmatprep.subr.mxu0 0.0
  %182 = vmatpush1.msra.mxu0 0.0
  %183 = vmatprep.subr.mxu0 0.0
  %184 = vmatpush1.msra.mxu0 0.0
  %185 = vmatprep.subr.mxu0 0.0
  %186 = vmatpush1.msra.mxu0 0.0
  %187 = vmatprep.subr.mxu0 0.0
  %188 = vmatpush1.msra.mxu0 0.0
  %189 = vmatprep.subr.mxu0 0.0
  %190 = vmatpush1.msra.mxu0 0.0
  %191 = vmatprep.subr.mxu0 0.0
  %192 = vmatpush1.msra.mxu0 0.0
  %193 = vmatprep.subr.mxu0 0.0
  %194 = vmatpush1.msra.mxu0 0.0
  %195 = vmatprep.subr.mxu0 0.0
  %196 = vmatpush1.msra.mxu0 0.0
  %197 = vmatprep.subr.mxu0 0.0
  %198 = vmatpush1.msra.mxu0 0.0
  %199 = vmatprep.subr.mxu0 0.0
  %200 = vmatpush1.msra.mxu0 0.0
  %201 = vmatprep.subr.mxu0 0.0
  %202 = vmatpush1.msra.mxu0 0.0
  %203 = vmatprep.subr.mxu0 0.0
  %204 = vmatpush1.msra.mxu0 0.0
  %205 = vmatprep.subr.mxu0 0.0
  %206 = vmatpush1.msra.mxu0 0.0
  %207 = vmatprep.subr.mxu0 0.0
  %208 = vmatpush1.msra.mxu0 0.0
  %209 = vmatprep.subr.mxu0 0.0
  %210 = vmatpush1.msra.mxu0 0.0
  %211 = vmatprep.mubr.f32.mxu0 0.0
  %212 = vmatmul.mubr.f32.gmra.mrb[0].mxu0 %v145
  %v213 = vpop.f32.mrb[0].mxu0
  %v214 = vadd.f32 0.0, %v213
  %v215 = vpop.f32.mrb[0].mxu0
  %216 = vdwg.mxu0
  %v217 = vld [vmem:[%s5] sm:$0x1]
  %v219 = vlaneseq
  %v220 = vshrl.u32 %v219, 7
  %v221 = vsub.s32 0, %v220
  %v222 = vrot.slane %v217, %v221
  %v224 = vadd.f32 %v139, %v222
  %v225 = vmul.f32 %v214, 2.0
  %v226 = vsub.f32 %v224, %v225
  %v227 = vmax.f32 %v226, 1e-12
  %v228 = vrsqrt.pop %v227
  %v229 = vmul.f32 %v227, %v228
  %vm230 = vcmp.eq.f32.partialorder %v227, inf
  %v231 = vsel %vm230, %v227, %v229
  %vm232 = vcmp.eq.f32.partialorder %v227, 0.0
  %v233 = vand.u32 %v227, 2147483648
  %v234 = vsel %vm232, %v233, %v231
  %v235 = vsel %vm30, 0.0, %v234
  %vm236 = vcmask 64512
  %v237 = vsel %vm236, %v235, 0.0
  %238 = vadd.xlane.f32.xlu0 %v237
  %v239 = vpop.xlane.xlu0 %238
  %v240 = vrcp.pop 8.0
  %v241 = vmul.f32 %v239, %v240
  %v242 = vrcp.pop %v241
  %v243 = vmul.f32 %v235, %v242
  %v244 = vmul.f32 %v243, 1.442695
  %v245 = vpow.pop %v244
  %v246 = vmul.f32 %v245, %v245
  %v247 = vrcp.pop %v246
  %v248 = vmul.f32 %v134, %v245
  %v249 = vsel %vm236, %v248, 0.0
  %250 = vadd.xlane.f32.xlu0 %v249
  %v251 = vpop.xlane.xlu0 %250
  %v252 = vsub.f32 1.0, %v134
  %v253 = vmul.f32 %v247, 7.389056
  %v254 = vmul.f32 %v252, %v253
  %v255 = vsel %vm236, %v254, 0.0
  %256 = vadd.xlane.f32.xlu0 %v255
  %v257 = vpop.xlane.xlu0 %256
  %v258 = vlog2.pop %v251
  %v259 = vmul.f32 %v258, 0.6931472
  %v260 = vadd.f32 %v257, 1.0
  %v261 = vlog2.pop %v260
  %v262 = vmul.f32 %v261, 0.6931472
  %v263 = vmul.f32 %v262, 0.5
  %v264 = vadd.f32 %v259, %v263
  %vm265 = vcmask 7168
  %266 = vst.msk [vmem:[%s6] sm:$0xff] %vm265, %v264
  // Predicated region
  $region26: #{tpu_custom_call.1} parent=0 // pred_check
    _
  $region27: #{tpu_custom_call.1} parent=0 // pred_check_branch
    %268 = sbr.rel (0) target = $region29
  $region28: #{tpu_custom_call.1} parent=0 // pred_region
    _
  $region29: #{tpu_custom_call.1} parent=0 // pred_fallthru
    _
  // Predicated region
  $region30: #{tpu_custom_call.1} parent=0 // pred_check
    _
  $region31: #{tpu_custom_call.1} parent=0 // pred_check_branch
    %270 = sbr.rel (0) target = $region33
  $region32: #{tpu_custom_call.1} parent=0 // pred_region
    _
  $region33: #{tpu_custom_call.1} parent=0 // pred_fallthru
    _

</llo_original>
